<compile_context>
chip_gen: v5e
topology: v5e:2x2
jax: 0.10.0
libtpu: 0.0.40
codegen_flags: <defaults>
</compile_context>

<pallas_src>
import functools

import jax
import jax.numpy as jnp
from jax.experimental import pallas as pl
from jax.experimental.pallas import tpu as pltpu


def _round_up(x, m):
    return (x + m - 1) // m * m


def _cnn_text_kernel(x_ref, cw_ref, cb_ref, fw_ref, fb_ref, o_ref, *, L_out):
    """x_ref: (TB, D_pad) bf16   cw_ref: (K_pad, C) bf16   cb_ref: (1, C) f32
       fw_ref: (NC, C) f32       fb_ref: (1, NC) f32       o_ref: (TB, NC) f32."""
    TB = x_ref.shape[0]
    NC = fw_ref.shape[0]
    K_pad = cw_ref.shape[0]

    x = x_ref[...]       # (TB, D_pad) bf16 — the only per-sample HBM stream
    cw = cw_ref[...]     # (K_pad, C) bf16, resident (constant index map)

    # Conv1d as L_out small MXU matmuls on static lane-slices of the resident x
    # tile.  ReLU + adaptive max-pool are a running max, so only the (TB, C)
    # accumulator (plus one conv tile) stays live no matter how big input_dim is.
    # Trip count is static; for very large input_dim this loop would become a
    # second "arbitrary" grid axis with the accumulator in VMEM scratch.
    pooled = jnp.dot(x[:, 0:K_pad], cw, preferred_element_type=jnp.float32)
    for l in range(1, L_out):
        conv_l = jnp.dot(x[:, l:l + K_pad], cw, preferred_element_type=jnp.float32)
        pooled = jnp.maximum(pooled, conv_l)
    # Bias is constant over L -> hoisted out of the max; clamping at 0 == ReLU.
    pooled = jnp.maximum(pooled + cb_ref[...], 0.0)          # (TB, C) f32

    fb = fb_ref[...]                                         # (1, NC)
    if NC == 1:
        # Tiny output width: VPU multiply + cross-lane sum beats a (TB, C)@(C, 1)
        # MXU matmul that would use a single useful output column.
        logits = jnp.sum(pooled * fw_ref[...], axis=-1, keepdims=True) + fb
    else:
        logits = jax.lax.dot_general(
            pooled, fw_ref[...], (((1,), (1,)), ((), ())),
            preferred_element_type=jnp.float32) + fb

    # sigmoid: exp on the EUP, approximate reciprocal also on the EUP.
    o_ref[...] = pl.reciprocal(1.0 + jnp.exp(-logits), approx=True)


def cnn_text_classifier(x, conv_w, conv_b, fc_w, fc_b, *, batch_tile=128):
    """x: (B, D).  Returns sigmoid probabilities of shape (B, num_classes)."""
    x = jnp.asarray(x)
    B, D = x.shape
    C_out, in_ch, K = conv_w.shape
    assert in_ch == 1, "module uses Conv1d with in_channels == 1"
    NC = fc_w.shape[0]
    L_out = D - K + 1
    assert L_out >= 1

    # ---- static layout / tiling choices ------------------------------------
    TB = min(_round_up(batch_tile, 8), _round_up(B, 8))   # batch rows per grid step
    B_pad = _round_up(B, TB)
    C_pad = _round_up(C_out, 128)                         # filters on the lane axis
    K_pad = _round_up(K, 8)                               # weight rows only (zero pad)
    D_pad = D + (K_pad - K)                               # so every lane-slice is in-bounds

    # ---- wrapper-side prep (single fused pad + bf16 cast; no im2col) --------
    xp = jnp.pad(x.astype(jnp.bfloat16), ((0, B_pad - B), (0, K_pad - K)))

    cw = jnp.zeros((K_pad, C_pad), jnp.float32)
    cw = cw.at[:K, :C_out].set(conv_w[:, 0, :].astype(jnp.float32).T)   # (K, C_out)
    cw = cw.astype(jnp.bfloat16)                                        # MXU-native
    cb = jnp.zeros((1, C_pad), jnp.float32).at[0, :C_out].set(conv_b.astype(jnp.float32))
    fw = jnp.zeros((NC, C_pad), jnp.float32).at[:, :C_out].set(fc_w.astype(jnp.float32))
    fb = fc_b.reshape(1, NC).astype(jnp.float32)

    # Generation-aware scoped-VMEM limit (blocks here are tiny, but be explicit).
    try:
        vmem_limit = int(min(64 * 1024 * 1024,
                             pltpu.get_tpu_info().vmem_capacity_bytes // 2))
    except Exception:
        vmem_limit = 32 * 1024 * 1024

    kernel = functools.partial(_cnn_text_kernel, L_out=L_out)
    out = pl.pallas_call(
        kernel,
        out_shape=jax.ShapeDtypeStruct((B_pad, NC), jnp.float32),
        grid=(B_pad // TB,),
        in_specs=[
            pl.BlockSpec((TB, D_pad), lambda i: (i, 0)),     # x: tiled over batch only
            pl.BlockSpec((K_pad, C_pad), lambda i: (0, 0)),  # conv weight (resident)
            pl.BlockSpec((1, C_pad), lambda i: (0, 0)),      # conv bias   (resident)
            pl.BlockSpec((NC, C_pad), lambda i: (0, 0)),     # fc weight   (resident)
            pl.BlockSpec((1, NC), lambda i: (0, 0)),         # fc bias     (resident)
        ],
        out_specs=pl.BlockSpec((TB, NC), lambda i: (i, 0)),
        compiler_params=pltpu.CompilerParams(
            dimension_semantics=("parallel",),               # megacore / dual-TC sharding
            vmem_limit_bytes=vmem_limit,
        ),
    )(xp, cw, cb, fw, fb)
    return out[:B]


def reference_forward(x, conv_w, conv_b, fc_w, fc_b):
    """Pure-JAX reference matching the PyTorch forward pass."""
    x = jnp.asarray(x, jnp.float32)
    B, D = x.shape
    C_out, _, K = conv_w.shape
    L_out = D - K + 1
    win = jnp.stack([x[:, k:k + L_out] for k in range(K)], axis=-1)      # (B, L, K)
    conv = jnp.einsum("blk,ck->blc", win, conv_w[:, 0, :],
                      precision=jax.lax.Precision.HIGHEST) + conv_b[None, None, :]
    pooled = jnp.max(jnp.maximum(conv, 0.0), axis=1)                      # (B, C)
    logits = jnp.dot(pooled, fc_w.T,
                     precision=jax.lax.Precision.HIGHEST) + fc_b[None, :]
    return jax.nn.sigmoid(logits)


if __name__ == "__main__":
    # Small, module-consistent shapes: batch=8 feature vectors of dim 32,
    # Conv1d(1 -> 128, kernel_size=3), Linear(128 -> 1).
    B, input_dim = 8, 32
    num_filters, kernel_size, num_classes = 128, 3, 1

    key = jax.random.PRNGKey(0)
    kx, kcw, kcb, kfw, kfb = jax.random.split(key, 5)
    x = jax.random.normal(kx, (B, input_dim), dtype=jnp.float32)
    conv_w = 0.1 * jax.random.normal(kcw, (num_filters, 1, kernel_size), jnp.float32)
    conv_b = 0.1 * jax.random.normal(kcb, (num_filters,), jnp.float32)
    fc_w = 0.1 * jax.random.normal(kfw, (num_classes, num_filters), jnp.float32)
    fc_b = 0.1 * jax.random.normal(kfb, (num_classes,), jnp.float32)

    out = jax.block_until_ready(cnn_text_classifier(x, conv_w, conv_b, fc_w, fc_b))
    ref = reference_forward(x, conv_w, conv_b, fc_w, fc_b)

    assert out.shape == (B, num_classes), out.shape
    # x/weights are streamed in bf16 (f32 accumulation) and the sigmoid uses the
    # EUP's approximate reciprocal, so tolerances are bf16-class.
    assert jnp.allclose(out, ref, atol=5e-3, rtol=5e-3), (out, ref)
    print("KERNEL_OK")
</pallas_src>

<mosaic_0001>
module attributes {stable_mosaic.version = 11 : i64} {
  func.func @_cnn_text_kernel(%arg0: i32, %arg1: memref<8x37xbf16, #tpu.memory_space<vmem>>, %arg2: memref<8x128xbf16, #tpu.memory_space<vmem>>, %arg3: memref<1x128xf32, #tpu.memory_space<vmem>>, %arg4: memref<1x128xf32, #tpu.memory_space<vmem>>, %arg5: memref<1x1xf32, #tpu.memory_space<vmem>>, %arg6: memref<8x1xf32, #tpu.memory_space<vmem>>) attributes {dimension_semantics = [#tpu.dimension_semantics<parallel>], iteration_bounds = array<i64: 1>, scalar_prefetch = 0 : i64, scratch_operands = 0 : i64, tpu.core_type = #tpu.core_type<tc>, window_params = [{transform_indices = @transform_0, window_bounds = array<i64: 8, 37>}, {pipeline_mode = #tpu.pipeline_mode<synchronous>, transform_indices = @transform_1, window_bounds = array<i64: 8, 128>}, {pipeline_mode = #tpu.pipeline_mode<synchronous>, transform_indices = @transform_2, window_bounds = array<i64: 1, 128>}, {pipeline_mode = #tpu.pipeline_mode<synchronous>, transform_indices = @transform_3, window_bounds = array<i64: 1, 128>}, {pipeline_mode = #tpu.pipeline_mode<synchronous>, transform_indices = @transform_4, window_bounds = array<i64: 1, 1>}, {transform_indices = @transform_5, window_bounds = array<i64: 8, 1>}]} {
    %c0 = arith.constant 0 : index
    %c0_0 = arith.constant 0 : index
    %0 = vector.load %arg1[%c0, %c0_0] : memref<8x37xbf16, #tpu.memory_space<vmem>>, vector<8x37xbf16>
    %c0_1 = arith.constant 0 : index
    %c0_2 = arith.constant 0 : index
    %1 = vector.load %arg2[%c0_1, %c0_2] : memref<8x128xbf16, #tpu.memory_space<vmem>>, vector<8x128xbf16>
    %2 = vector.extract_strided_slice %0 {offsets = [0, 0], sizes = [8, 8], strides = [1, 1]} : vector<8x37xbf16> to vector<8x8xbf16>
    %cst = arith.constant dense<0.000000e+00> : vector<8x128xf32>
    %3 = tpu.matmul %2, %1, %cst {dimension_numbers = #tpu.dot_dimension_numbers<[1], [0], [0], [1], [0, 0, 1, 1], [], []>} : vector<8x8xbf16>, vector<8x128xbf16>, vector<8x128xf32> -> vector<8x128xf32>
    %4 = vector.extract_strided_slice %0 {offsets = [0, 1], sizes = [8, 8], strides = [1, 1]} : vector<8x37xbf16> to vector<8x8xbf16>
    %cst_3 = arith.constant dense<0.000000e+00> : vector<8x128xf32>
    %5 = tpu.matmul %4, %1, %cst_3 {dimension_numbers = #tpu.dot_dimension_numbers<[1], [0], [0], [1], [0, 0, 1, 1], [], []>} : vector<8x8xbf16>, vector<8x128xbf16>, vector<8x128xf32> -> vector<8x128xf32>
    %6 = arith.maximumf %3, %5 : vector<8x128xf32>
    %7 = vector.extract_strided_slice %0 {offsets = [0, 2], sizes = [8, 8], strides = [1, 1]} : vector<8x37xbf16> to vector<8x8xbf16>
    %cst_4 = arith.constant dense<0.000000e+00> : vector<8x128xf32>
    %8 = tpu.matmul %7, %1, %cst_4 {dimension_numbers = #tpu.dot_dimension_numbers<[1], [0], [0], [1], [0, 0, 1, 1], [], []>} : vector<8x8xbf16>, vector<8x128xbf16>, vector<8x128xf32> -> vector<8x128xf32>
    %9 = arith.maximumf %6, %8 : vector<8x128xf32>
    %10 = vector.extract_strided_slice %0 {offsets = [0, 3], sizes = [8, 8], strides = [1, 1]} : vector<8x37xbf16> to vector<8x8xbf16>
    %cst_5 = arith.constant dense<0.000000e+00> : vector<8x128xf32>
    %11 = tpu.matmul %10, %1, %cst_5 {dimension_numbers = #tpu.dot_dimension_numbers<[1], [0], [0], [1], [0, 0, 1, 1], [], []>} : vector<8x8xbf16>, vector<8x128xbf16>, vector<8x128xf32> -> vector<8x128xf32>
    %12 = arith.maximumf %9, %11 : vector<8x128xf32>
    %13 = vector.extract_strided_slice %0 {offsets = [0, 4], sizes = [8, 8], strides = [1, 1]} : vector<8x37xbf16> to vector<8x8xbf16>
    %cst_6 = arith.constant dense<0.000000e+00> : vector<8x128xf32>
    %14 = tpu.matmul %13, %1, %cst_6 {dimension_numbers = #tpu.dot_dimension_numbers<[1], [0], [0], [1], [0, 0, 1, 1], [], []>} : vector<8x8xbf16>, vector<8x128xbf16>, vector<8x128xf32> -> vector<8x128xf32>
    %15 = arith.maximumf %12, %14 : vector<8x128xf32>
    %16 = vector.extract_strided_slice %0 {offsets = [0, 5], sizes = [8, 8], strides = [1, 1]} : vector<8x37xbf16> to vector<8x8xbf16>
    %cst_7 = arith.constant dense<0.000000e+00> : vector<8x128xf32>
    %17 = tpu.matmul %16, %1, %cst_7 {dimension_numbers = #tpu.dot_dimension_numbers<[1], [0], [0], [1], [0, 0, 1, 1], [], []>} : vector<8x8xbf16>, vector<8x128xbf16>, vector<8x128xf32> -> vector<8x128xf32>
    %18 = arith.maximumf %15, %17 : vector<8x128xf32>
    %19 = vector.extract_strided_slice %0 {offsets = [0, 6], sizes = [8, 8], strides = [1, 1]} : vector<8x37xbf16> to vector<8x8xbf16>
    %cst_8 = arith.constant dense<0.000000e+00> : vector<8x128xf32>
    %20 = tpu.matmul %19, %1, %cst_8 {dimension_numbers = #tpu.dot_dimension_numbers<[1], [0], [0], [1], [0, 0, 1, 1], [], []>} : vector<8x8xbf16>, vector<8x128xbf16>, vector<8x128xf32> -> vector<8x128xf32>
    %21 = arith.maximumf %18, %20 : vector<8x128xf32>
    %22 = vector.extract_strided_slice %0 {offsets = [0, 7], sizes = [8, 8], strides = [1, 1]} : vector<8x37xbf16> to vector<8x8xbf16>
    %cst_9 = arith.constant dense<0.000000e+00> : vector<8x128xf32>
    %23 = tpu.matmul %22, %1, %cst_9 {dimension_numbers = #tpu.dot_dimension_numbers<[1], [0], [0], [1], [0, 0, 1, 1], [], []>} : vector<8x8xbf16>, vector<8x128xbf16>, vector<8x128xf32> -> vector<8x128xf32>
    %24 = arith.maximumf %21, %23 : vector<8x128xf32>
    %25 = vector.extract_strided_slice %0 {offsets = [0, 8], sizes = [8, 8], strides = [1, 1]} : vector<8x37xbf16> to vector<8x8xbf16>
    %cst_10 = arith.constant dense<0.000000e+00> : vector<8x128xf32>
    %26 = tpu.matmul %25, %1, %cst_10 {dimension_numbers = #tpu.dot_dimension_numbers<[1], [0], [0], [1], [0, 0, 1, 1], [], []>} : vector<8x8xbf16>, vector<8x128xbf16>, vector<8x128xf32> -> vector<8x128xf32>
    %27 = arith.maximumf %24, %26 : vector<8x128xf32>
    %28 = vector.extract_strided_slice %0 {offsets = [0, 9], sizes = [8, 8], strides = [1, 1]} : vector<8x37xbf16> to vector<8x8xbf16>
    %cst_11 = arith.constant dense<0.000000e+00> : vector<8x128xf32>
    %29 = tpu.matmul %28, %1, %cst_11 {dimension_numbers = #tpu.dot_dimension_numbers<[1], [0], [0], [1], [0, 0, 1, 1], [], []>} : vector<8x8xbf16>, vector<8x128xbf16>, vector<8x128xf32> -> vector<8x128xf32>
    %30 = arith.maximumf %27, %29 : vector<8x128xf32>
    %31 = vector.extract_strided_slice %0 {offsets = [0, 10], sizes = [8, 8], strides = [1, 1]} : vector<8x37xbf16> to vector<8x8xbf16>
    %cst_12 = arith.constant dense<0.000000e+00> : vector<8x128xf32>
    %32 = tpu.matmul %31, %1, %cst_12 {dimension_numbers = #tpu.dot_dimension_numbers<[1], [0], [0], [1], [0, 0, 1, 1], [], []>} : vector<8x8xbf16>, vector<8x128xbf16>, vector<8x128xf32> -> vector<8x128xf32>
    %33 = arith.maximumf %30, %32 : vector<8x128xf32>
    %34 = vector.extract_strided_slice %0 {offsets = [0, 11], sizes = [8, 8], strides = [1, 1]} : vector<8x37xbf16> to vector<8x8xbf16>
    %cst_13 = arith.constant dense<0.000000e+00> : vector<8x128xf32>
    %35 = tpu.matmul %34, %1, %cst_13 {dimension_numbers = #tpu.dot_dimension_numbers<[1], [0], [0], [1], [0, 0, 1, 1], [], []>} : vector<8x8xbf16>, vector<8x128xbf16>, vector<8x128xf32> -> vector<8x128xf32>
    %36 = arith.maximumf %33, %35 : vector<8x128xf32>
    %37 = vector.extract_strided_slice %0 {offsets = [0, 12], sizes = [8, 8], strides = [1, 1]} : vector<8x37xbf16> to vector<8x8xbf16>
    %cst_14 = arith.constant dense<0.000000e+00> : vector<8x128xf32>
    %38 = tpu.matmul %37, %1, %cst_14 {dimension_numbers = #tpu.dot_dimension_numbers<[1], [0], [0], [1], [0, 0, 1, 1], [], []>} : vector<8x8xbf16>, vector<8x128xbf16>, vector<8x128xf32> -> vector<8x128xf32>
    %39 = arith.maximumf %36, %38 : vector<8x128xf32>
    %40 = vector.extract_strided_slice %0 {offsets = [0, 13], sizes = [8, 8], strides = [1, 1]} : vector<8x37xbf16> to vector<8x8xbf16>
    %cst_15 = arith.constant dense<0.000000e+00> : vector<8x128xf32>
    %41 = tpu.matmul %40, %1, %cst_15 {dimension_numbers = #tpu.dot_dimension_numbers<[1], [0], [0], [1], [0, 0, 1, 1], [], []>} : vector<8x8xbf16>, vector<8x128xbf16>, vector<8x128xf32> -> vector<8x128xf32>
    %42 = arith.maximumf %39, %41 : vector<8x128xf32>
    %43 = vector.extract_strided_slice %0 {offsets = [0, 14], sizes = [8, 8], strides = [1, 1]} : vector<8x37xbf16> to vector<8x8xbf16>
    %cst_16 = arith.constant dense<0.000000e+00> : vector<8x128xf32>
    %44 = tpu.matmul %43, %1, %cst_16 {dimension_numbers = #tpu.dot_dimension_numbers<[1], [0], [0], [1], [0, 0, 1, 1], [], []>} : vector<8x8xbf16>, vector<8x128xbf16>, vector<8x128xf32> -> vector<8x128xf32>
    %45 = arith.maximumf %42, %44 : vector<8x128xf32>
    %46 = vector.extract_strided_slice %0 {offsets = [0, 15], sizes = [8, 8], strides = [1, 1]} : vector<8x37xbf16> to vector<8x8xbf16>
    %cst_17 = arith.constant dense<0.000000e+00> : vector<8x128xf32>
    %47 = tpu.matmul %46, %1, %cst_17 {dimension_numbers = #tpu.dot_dimension_numbers<[1], [0], [0], [1], [0, 0, 1, 1], [], []>} : vector<8x8xbf16>, vector<8x128xbf16>, vector<8x128xf32> -> vector<8x128xf32>
    %48 = arith.maximumf %45, %47 : vector<8x128xf32>
    %49 = vector.extract_strided_slice %0 {offsets = [0, 16], sizes = [8, 8], strides = [1, 1]} : vector<8x37xbf16> to vector<8x8xbf16>
    %cst_18 = arith.constant dense<0.000000e+00> : vector<8x128xf32>
    %50 = tpu.matmul %49, %1, %cst_18 {dimension_numbers = #tpu.dot_dimension_numbers<[1], [0], [0], [1], [0, 0, 1, 1], [], []>} : vector<8x8xbf16>, vector<8x128xbf16>, vector<8x128xf32> -> vector<8x128xf32>
    %51 = arith.maximumf %48, %50 : vector<8x128xf32>
    %52 = vector.extract_strided_slice %0 {offsets = [0, 17], sizes = [8, 8], strides = [1, 1]} : vector<8x37xbf16> to vector<8x8xbf16>
    %cst_19 = arith.constant dense<0.000000e+00> : vector<8x128xf32>
    %53 = tpu.matmul %52, %1, %cst_19 {dimension_numbers = #tpu.dot_dimension_numbers<[1], [0], [0], [1], [0, 0, 1, 1], [], []>} : vector<8x8xbf16>, vector<8x128xbf16>, vector<8x128xf32> -> vector<8x128xf32>
    %54 = arith.maximumf %51, %53 : vector<8x128xf32>
    %55 = vector.extract_strided_slice %0 {offsets = [0, 18], sizes = [8, 8], strides = [1, 1]} : vector<8x37xbf16> to vector<8x8xbf16>
    %cst_20 = arith.constant dense<0.000000e+00> : vector<8x128xf32>
    %56 = tpu.matmul %55, %1, %cst_20 {dimension_numbers = #tpu.dot_dimension_numbers<[1], [0], [0], [1], [0, 0, 1, 1], [], []>} : vector<8x8xbf16>, vector<8x128xbf16>, vector<8x128xf32> -> vector<8x128xf32>
    %57 = arith.maximumf %54, %56 : vector<8x128xf32>
    %58 = vector.extract_strided_slice %0 {offsets = [0, 19], sizes = [8, 8], strides = [1, 1]} : vector<8x37xbf16> to vector<8x8xbf16>
    %cst_21 = arith.constant dense<0.000000e+00> : vector<8x128xf32>
    %59 = tpu.matmul %58, %1, %cst_21 {dimension_numbers = #tpu.dot_dimension_numbers<[1], [0], [0], [1], [0, 0, 1, 1], [], []>} : vector<8x8xbf16>, vector<8x128xbf16>, vector<8x128xf32> -> vector<8x128xf32>
    %60 = arith.maximumf %57, %59 : vector<8x128xf32>
    %61 = vector.extract_strided_slice %0 {offsets = [0, 20], sizes = [8, 8], strides = [1, 1]} : vector<8x37xbf16> to vector<8x8xbf16>
    %cst_22 = arith.constant dense<0.000000e+00> : vector<8x128xf32>
    %62 = tpu.matmul %61, %1, %cst_22 {dimension_numbers = #tpu.dot_dimension_numbers<[1], [0], [0], [1], [0, 0, 1, 1], [], []>} : vector<8x8xbf16>, vector<8x128xbf16>, vector<8x128xf32> -> vector<8x128xf32>
    %63 = arith.maximumf %60, %62 : vector<8x128xf32>
    %64 = vector.extract_strided_slice %0 {offsets = [0, 21], sizes = [8, 8], strides = [1, 1]} : vector<8x37xbf16> to vector<8x8xbf16>
    %cst_23 = arith.constant dense<0.000000e+00> : vector<8x128xf32>
    %65 = tpu.matmul %64, %1, %cst_23 {dimension_numbers = #tpu.dot_dimension_numbers<[1], [0], [0], [1], [0, 0, 1, 1], [], []>} : vector<8x8xbf16>, vector<8x128xbf16>, vector<8x128xf32> -> vector<8x128xf32>
    %66 = arith.maximumf %63, %65 : vector<8x128xf32>
    %67 = vector.extract_strided_slice %0 {offsets = [0, 22], sizes = [8, 8], strides = [1, 1]} : vector<8x37xbf16> to vector<8x8xbf16>
    %cst_24 = arith.constant dense<0.000000e+00> : vector<8x128xf32>
    %68 = tpu.matmul %67, %1, %cst_24 {dimension_numbers = #tpu.dot_dimension_numbers<[1], [0], [0], [1], [0, 0, 1, 1], [], []>} : vector<8x8xbf16>, vector<8x128xbf16>, vector<8x128xf32> -> vector<8x128xf32>
    %69 = arith.maximumf %66, %68 : vector<8x128xf32>
    %70 = vector.extract_strided_slice %0 {offsets = [0, 23], sizes = [8, 8], strides = [1, 1]} : vector<8x37xbf16> to vector<8x8xbf16>
    %cst_25 = arith.constant dense<0.000000e+00> : vector<8x128xf32>
    %71 = tpu.matmul %70, %1, %cst_25 {dimension_numbers = #tpu.dot_dimension_numbers<[1], [0], [0], [1], [0, 0, 1, 1], [], []>} : vector<8x8xbf16>, vector<8x128xbf16>, vector<8x128xf32> -> vector<8x128xf32>
    %72 = arith.maximumf %69, %71 : vector<8x128xf32>
    %73 = vector.extract_strided_slice %0 {offsets = [0, 24], sizes = [8, 8], strides = [1, 1]} : vector<8x37xbf16> to vector<8x8xbf16>
    %cst_26 = arith.constant dense<0.000000e+00> : vector<8x128xf32>
    %74 = tpu.matmul %73, %1, %cst_26 {dimension_numbers = #tpu.dot_dimension_numbers<[1], [0], [0], [1], [0, 0, 1, 1], [], []>} : vector<8x8xbf16>, vector<8x128xbf16>, vector<8x128xf32> -> vector<8x128xf32>
    %75 = arith.maximumf %72, %74 : vector<8x128xf32>
    %76 = vector.extract_strided_slice %0 {offsets = [0, 25], sizes = [8, 8], strides = [1, 1]} : vector<8x37xbf16> to vector<8x8xbf16>
    %cst_27 = arith.constant dense<0.000000e+00> : vector<8x128xf32>
    %77 = tpu.matmul %76, %1, %cst_27 {dimension_numbers = #tpu.dot_dimension_numbers<[1], [0], [0], [1], [0, 0, 1, 1], [], []>} : vector<8x8xbf16>, vector<8x128xbf16>, vector<8x128xf32> -> vector<8x128xf32>
    %78 = arith.maximumf %75, %77 : vector<8x128xf32>
    %79 = vector.extract_strided_slice %0 {offsets = [0, 26], sizes = [8, 8], strides = [1, 1]} : vector<8x37xbf16> to vector<8x8xbf16>
    %cst_28 = arith.constant dense<0.000000e+00> : vector<8x128xf32>
    %80 = tpu.matmul %79, %1, %cst_28 {dimension_numbers = #tpu.dot_dimension_numbers<[1], [0], [0], [1], [0, 0, 1, 1], [], []>} : vector<8x8xbf16>, vector<8x128xbf16>, vector<8x128xf32> -> vector<8x128xf32>
    %81 = arith.maximumf %78, %80 : vector<8x128xf32>
    %82 = vector.extract_strided_slice %0 {offsets = [0, 27], sizes = [8, 8], strides = [1, 1]} : vector<8x37xbf16> to vector<8x8xbf16>
    %cst_29 = arith.constant dense<0.000000e+00> : vector<8x128xf32>
    %83 = tpu.matmul %82, %1, %cst_29 {dimension_numbers = #tpu.dot_dimension_numbers<[1], [0], [0], [1], [0, 0, 1, 1], [], []>} : vector<8x8xbf16>, vector<8x128xbf16>, vector<8x128xf32> -> vector<8x128xf32>
    %84 = arith.maximumf %81, %83 : vector<8x128xf32>
    %85 = vector.extract_strided_slice %0 {offsets = [0, 28], sizes = [8, 8], strides = [1, 1]} : vector<8x37xbf16> to vector<8x8xbf16>
    %cst_30 = arith.constant dense<0.000000e+00> : vector<8x128xf32>
    %86 = tpu.matmul %85, %1, %cst_30 {dimension_numbers = #tpu.dot_dimension_numbers<[1], [0], [0], [1], [0, 0, 1, 1], [], []>} : vector<8x8xbf16>, vector<8x128xbf16>, vector<8x128xf32> -> vector<8x128xf32>
    %87 = arith.maximumf %84, %86 : vector<8x128xf32>
    %88 = vector.extract_strided_slice %0 {offsets = [0, 29], sizes = [8, 8], strides = [1, 1]} : vector<8x37xbf16> to vector<8x8xbf16>
    %cst_31 = arith.constant dense<0.000000e+00> : vector<8x128xf32>
    %89 = tpu.matmul %88, %1, %cst_31 {dimension_numbers = #tpu.dot_dimension_numbers<[1], [0], [0], [1], [0, 0, 1, 1], [], []>} : vector<8x8xbf16>, vector<8x128xbf16>, vector<8x128xf32> -> vector<8x128xf32>
    %90 = arith.maximumf %87, %89 : vector<8x128xf32>
    %c0_32 = arith.constant 0 : index
    %c0_33 = arith.constant 0 : index
    %91 = vector.load %arg3[%c0_32, %c0_33] : memref<1x128xf32, #tpu.memory_space<vmem>>, vector<1x128xf32>
    %92 = vector.broadcast %91 : vector<1x128xf32> to vector<8x128xf32>
    %93 = arith.addf %90, %92 : vector<8x128xf32>
    %cst_34 = arith.constant 0.000000e+00 : f32
    %94 = vector.broadcast %cst_34 : f32 to vector<8x128xf32>
    %95 = arith.maximumf %93, %94 : vector<8x128xf32>
    %c0_35 = arith.constant 0 : index
    %c0_36 = arith.constant 0 : index
    %96 = vector.load %arg5[%c0_35, %c0_36] : memref<1x1xf32, #tpu.memory_space<vmem>>, vector<1x1xf32>
    %c0_37 = arith.constant 0 : index
    %c0_38 = arith.constant 0 : index
    %97 = vector.load %arg4[%c0_37, %c0_38] : memref<1x128xf32, #tpu.memory_space<vmem>>, vector<1x128xf32>
    %98 = vector.broadcast %97 : vector<1x128xf32> to vector<8x128xf32>
    %99 = arith.mulf %95, %98 : vector<8x128xf32>
    %cst_39 = arith.constant dense<0.000000e+00> : vector<8xf32>
    %100 = vector.multi_reduction <add>, %99, %cst_39 [1] : vector<8x128xf32> to vector<8xf32>
    %101 = vector.shape_cast %100 : vector<8xf32> to vector<8x1xf32>
    %102 = vector.broadcast %96 : vector<1x1xf32> to vector<8x1xf32>
    %103 = arith.addf %101, %102 : vector<8x1xf32>
    %cst_40 = arith.constant 0.000000e+00 : f32
    %104 = vector.broadcast %cst_40 : f32 to vector<8x1xf32>
    %105 = arith.subf %104, %103 : vector<8x1xf32>
    %106 = math.exp %105 : vector<8x1xf32>
    %cst_41 = arith.constant 1.000000e+00 : f32
    %107 = vector.broadcast %cst_41 : f32 to vector<8x1xf32>
    %108 = arith.addf %107, %106 : vector<8x1xf32>
    %109 = tpu.reciprocal %108 {approx = true} : vector<8x1xf32> -> vector<8x1xf32>
    %c0_42 = arith.constant 0 : index
    %c0_43 = arith.constant 0 : index
    %110 = vector.load %arg6[%c0_42, %c0_43] : memref<8x1xf32, #tpu.memory_space<vmem>>, vector<8x1xf32>
    tpu.vector_store %arg6[%c0_42, %c0_43], %109 {strides = array<i32>} : memref<8x1xf32, #tpu.memory_space<vmem>>, vector<8x1xf32>,
    return
  }
  func.func @transform_0(%arg0: i32) -> (i32, i32) {
    %c0_i32 = arith.constant 0 : i32
    %c0_i32_0 = arith.constant 0 : i32
    return %arg0, %c0_i32 : i32, i32
  }
  func.func @transform_1(%arg0: i32) -> (i32, i32) {
    %c0_i32 = arith.constant 0 : i32
    %c0_i32_0 = arith.constant 0 : i32
    %c0_i32_1 = arith.constant 0 : i32
    return %c0_i32, %c0_i32_0 : i32, i32
  }
  func.func @transform_2(%arg0: i32) -> (i32, i32) {
    %c0_i32 = arith.constant 0 : i32
    %c0_i32_0 = arith.constant 0 : i32
    %c0_i32_1 = arith.constant 0 : i32
    return %c0_i32, %c0_i32_0 : i32, i32
  }
  func.func @transform_3(%arg0: i32) -> (i32, i32) {
    %c0_i32 = arith.constant 0 : i32
    %c0_i32_0 = arith.constant 0 : i32
    %c0_i32_1 = arith.constant 0 : i32
    return %c0_i32, %c0_i32_0 : i32, i32
  }
  func.func @transform_4(%arg0: i32) -> (i32, i32) {
    %c0_i32 = arith.constant 0 : i32
    %c0_i32_0 = arith.constant 0 : i32
    %c0_i32_1 = arith.constant 0 : i32
    return %c0_i32, %c0_i32_0 : i32, i32
  }
  func.func @transform_5(%arg0: i32) -> (i32, i32) {
    %c0_i32 = arith.constant 0 : i32
    %c0_i32_0 = arith.constant 0 : i32
    return %arg0, %c0_i32 : i32, i32
  }
}

</mosaic_0001>

<llo_original>
// kernel: tpu_custom_call.1
$region0: #{tpu_custom_call.1}
  #allocation0 [shape = 'u32[]', space=smem, size = 0x4, offset = 0x4, fixed_abs, tag = 'smem constant byte address 0x4 - core index']
  #allocation1 [shape = 'u32[72,128]{1,0:T(1,128)}', space=vmem, size = 0x9000, scoped, tag = 'internal scratch']
  #allocation2 [shape = 'f32[1,1]{1,0:T(1,128)S(1)}', space=vmem, size = 0x200, scoped, tag = 'scoped memory for tpu_custom_call.1']
  %s0 = inlined_call_operand.hbm [shape: bf16[8,37], index: 0, kind: input, shape index: {}]
  %s1 = inlined_call_operand.hbm [shape: bf16[8,128], index: 1, kind: input, shape index: {}]
  %s2 = inlined_call_operand.vmem [shape: f32[1,128], index: 2, kind: input, shape index: {}]
  %s3 = inlined_call_operand.vmem [shape: f32[1,128], index: 3, kind: input, shape index: {}]
  %s4 = inlined_call_operand.<no memory space> [shape: f32[1,1], index: 4, kind: input, shape index: {}]
  %s5 = inlined_call_operand.vmem [shape: f32[8,1], index: 5, kind: output, shape index: {}]
  %s6 = sld [smem:[#allocation0]]
  $region38: #{tpu_custom_call.1} parent=0
    _
  %s8 = ssub.s32 1, %s6
  %s9 = scalar_select 0, %s8, %s6
  %v10 = vstv %s4
  %11 = vst [vmem:[#allocation2] sm:$0x1] %v10
  $region1: #{tpu_custom_call.1} parent=0
    #allocation3 [shape = 'u8[2048]{0}', space=vmem, size = 0x800, scoped, tag = 'input window, operand 0, single buffered']
    #allocation4 [shape = 's32[1]{0}', space=sflag, size = 0x4, scoped, tag = 'scoped memory for tpu_custom_call.1']
    #allocation5 [shape = 'u8[2048]{0}', space=vmem, size = 0x800, scoped, tag = 'input window, operand 1, single buffered']
    #allocation6 [shape = 's32[1]{0}', space=sflag, size = 0x4, scoped, tag = 'scoped memory for tpu_custom_call.1']
    %12 = vsyncpa [#allocation4], 0
    %13 = vsyncpa [#allocation6], 0
    // Predicated region
    $region2: #{tpu_custom_call.1} parent=1 // pred_check
      _
    $region3: #{tpu_custom_call.1} parent=1 // pred_check_branch
      %15 = sbr.rel (0) target = $region5
    $region4: #{tpu_custom_call.1} parent=1 // pred_region
      %17 = vsyncadd [#allocation4], 0
      %s19 = sshll.u32 %s0, 4
      %s20 = int_to_ptr.hbm [resolvable:$true] %s19
      %s21 = sshll.u32 [#allocation3], 4
      %s22 = int_to_ptr.vmem [resolvable:$true] %s21
      %24 = dma.hbm_to_vmem [thread:$0]  %s20, 64, %s22, [#allocation4]
    $region5: #{tpu_custom_call.1} parent=1 // pred_fallthru
      _
    // Predicated region
    $region6: #{tpu_custom_call.1} parent=1 // pred_check
      _
    $region7: #{tpu_custom_call.1} parent=1 // pred_check_branch
      %26 = sbr.rel (0) target = $region9
    $region8: #{tpu_custom_call.1} parent=1 // pred_region
      %28 = vsyncadd [#allocation6], 0
      %s30 = sshll.u32 %s1, 4
      %s31 = int_to_ptr.hbm [resolvable:$true] %s30
      %s32 = sshll.u32 [#allocation5], 4
      %s33 = int_to_ptr.vmem [resolvable:$true] %s32
      %35 = dma.hbm_to_vmem [thread:$0]  %s31, 64, %s33, [#allocation6]
    $region9: #{tpu_custom_call.1} parent=1 // pred_fallthru
      _
    // Predicated region
    $region10: #{tpu_custom_call.1} parent=1 // pred_check
      _
    $region11: #{tpu_custom_call.1} parent=1 // pred_check_branch
      %37 = sbr.rel (0) target = $region13
    $region12: #{tpu_custom_call.1} parent=1 // pred_region
      _
    $region13: #{tpu_custom_call.1} parent=1 // pred_fallthru
      _
    // Predicated region
    $region14: #{tpu_custom_call.1} parent=1 // pred_check
      _
    $region15: #{tpu_custom_call.1} parent=1 // pred_check_branch
      %39 = sbr.rel (0) target = $region17
    $region16: #{tpu_custom_call.1} parent=1 // pred_region
      _
    $region17: #{tpu_custom_call.1} parent=1 // pred_fallthru
      _
    // Predicated region
    $region18: #{tpu_custom_call.1} parent=1 // pred_check
      _
    $region19: #{tpu_custom_call.1} parent=1 // pred_check_branch
      %41 = sbr.rel (0) target = $region21
    $region20: #{tpu_custom_call.1} parent=1 // pred_region
      _
    $region21: #{tpu_custom_call.1} parent=1 // pred_fallthru
      _
    // Predicated region
    $region22: #{tpu_custom_call.1} parent=1 // pred_check
      _
    $region23: #{tpu_custom_call.1} parent=1 // pred_check_branch
      %43 = sbr.rel (0) target = $region25
    $region24: #{tpu_custom_call.1} parent=1 // pred_region
      %45 = dma.done [#allocation4], 64
    $region25: #{tpu_custom_call.1} parent=1 // pred_fallthru
      _
    // Predicated region
    $region26: #{tpu_custom_call.1} parent=1 // pred_check
      _
    $region27: #{tpu_custom_call.1} parent=1 // pred_check_branch
      %47 = sbr.rel (0) target = $region29
    $region28: #{tpu_custom_call.1} parent=1 // pred_region
      %49 = dma.done [#allocation6], 64
    $region29: #{tpu_custom_call.1} parent=1 // pred_fallthru
      _
    %v51 = vld [vmem:[#allocation3] sm:$0xf]
    %v52 = vld [vmem:[#allocation5] sm:$0xf]
    %vm53 = vcmask 64512
    %v55 = vsel %vm53, %v51, 0
    %vm57 = vcmask 1043456
    %v59 = vsel %vm57, %v52, 0
    %61 = vmatpush.bf16.msra.mxu0 0
    %62 = vmatpush.bf16.msra.mxu0 0
    %63 = vmatpush.bf16.msra.mxu0 0
    %64 = vmatpush.bf16.msra.mxu0 0
    %65 = vmatpush.bf16.msra.mxu0 0
    %66 = vmatpush.bf16.msra.mxu0 0
    %67 = vmatpush.bf16.msra.mxu0 0
    %68 = vmatpush.bf16.msra.mxu0 %v59
    %69 = vmatmul.bf16.gmra.mxu0 %v55
    %v70 = vpop.f32.mrf.mxu0
    %v71 = vadd.f32 0.0, %v70
    %v72 = vpop.f32.mrf.mxu0
    %73 = vdwg.mxu0
    %v75 = vunpack.c.l.b16 %v51
    %v76 = vpack.c.b16 %v75, %v75
    %77 = vrot.lane.b32.xlu0 %v76, 127
    %v78 = vpop.permute.xlu0 %77
    %v80 = vsel %vm53, %v78, 0
    %82 = vmatpush.bf16.msra.mxu0 0
    %83 = vmatpush.bf16.msra.mxu0 0
    %84 = vmatpush.bf16.msra.mxu0 0
    %85 = vmatpush.bf16.msra.mxu0 0
    %86 = vmatpush.bf16.msra.mxu0 0
    %87 = vmatpush.bf16.msra.mxu0 0
    %88 = vmatpush.bf16.msra.mxu0 0
    %89 = vmatpush.bf16.msra.mxu0 %v59
    %90 = vmatmul.bf16.gmra.mxu0 %v80
    %v91 = vpop.f32.mrf.mxu0
    %v92 = vadd.f32 0.0, %v91
    %v93 = vpop.f32.mrf.mxu0
    %94 = vdwg.mxu0
    %v95 = vmax.f32 %v71, %v92
    %96 = vrot.lane.b32.xlu0 %v76, 126
    %v97 = vpop.permute.xlu0 %96
    %v99 = vsel %vm53, %v97, 0
    %101 = vmatpush.bf16.msra.mxu0 0
    %102 = vmatpush.bf16.msra.mxu0 0
    %103 = vmatpush.bf16.msra.mxu0 0
    %104 = vmatpush.bf16.msra.mxu0 0
    %105 = vmatpush.bf16.msra.mxu0 0
    %106 = vmatpush.bf16.msra.mxu0 0
    %107 = vmatpush.bf16.msra.mxu0 0
    %108 = vmatpush.bf16.msra.mxu0 %v59
    %109 = vmatmul.bf16.gmra.mxu0 %v99
    %v110 = vpop.f32.mrf.mxu0
    %v111 = vadd.f32 0.0, %v110
    %v112 = vpop.f32.mrf.mxu0
    %113 = vdwg.mxu0
    %v114 = vmax.f32 %v95, %v111
    %115 = vrot.lane.b32.xlu0 %v76, 125
    %v116 = vpop.permute.xlu0 %115
    %v118 = vsel %vm53, %v116, 0
    %120 = vmatpush.bf16.msra.mxu0 0
    %121 = vmatpush.bf16.msra.mxu0 0
    %122 = vmatpush.bf16.msra.mxu0 0
    %123 = vmatpush.bf16.msra.mxu0 0
    %124 = vmatpush.bf16.msra.mxu0 0
    %125 = vmatpush.bf16.msra.mxu0 0
    %126 = vmatpush.bf16.msra.mxu0 0
    %127 = vmatpush.bf16.msra.mxu0 %v59
    %128 = vmatmul.bf16.gmra.mxu0 %v118
    %v129 = vpop.f32.mrf.mxu0
    %v130 = vadd.f32 0.0, %v129
    %v131 = vpop.f32.mrf.mxu0
    %132 = vdwg.mxu0
    %v133 = vmax.f32 %v114, %v130
    %134 = vrot.lane.b32.xlu0 %v76, 124
    %v135 = vpop.permute.xlu0 %134
    %v137 = vsel %vm53, %v135, 0
    %139 = vmatpush.bf16.msra.mxu0 0
    %140 = vmatpush.bf16.msra.mxu0 0
    %141 = vmatpush.bf16.msra.mxu0 0
    %142 = vmatpush.bf16.msra.mxu0 0
    %143 = vmatpush.bf16.msra.mxu0 0
    %144 = vmatpush.bf16.msra.mxu0 0
    %145 = vmatpush.bf16.msra.mxu0 0
    %146 = vmatpush.bf16.msra.mxu0 %v59
    %147 = vmatmul.bf16.gmra.mxu0 %v137
    %v148 = vpop.f32.mrf.mxu0
    %v149 = vadd.f32 0.0, %v148
    %v150 = vpop.f32.mrf.mxu0
    %151 = vdwg.mxu0
    %v152 = vmax.f32 %v133, %v149
    %153 = vrot.lane.b32.xlu0 %v76, 123
    %v154 = vpop.permute.xlu0 %153
    %v156 = vsel %vm53, %v154, 0
    %158 = vmatpush.bf16.msra.mxu0 0
    %159 = vmatpush.bf16.msra.mxu0 0
    %160 = vmatpush.bf16.msra.mxu0 0
    %161 = vmatpush.bf16.msra.mxu0 0
    %162 = vmatpush.bf16.msra.mxu0 0
    %163 = vmatpush.bf16.msra.mxu0 0
    %164 = vmatpush.bf16.msra.mxu0 0
    %165 = vmatpush.bf16.msra.mxu0 %v59
    %166 = vmatmul.bf16.gmra.mxu0 %v156
    %v167 = vpop.f32.mrf.mxu0
    %v168 = vadd.f32 0.0, %v167
    %v169 = vpop.f32.mrf.mxu0
    %170 = vdwg.mxu0
    %v171 = vmax.f32 %v152, %v168
    %172 = vrot.lane.b32.xlu0 %v76, 122
    %v173 = vpop.permute.xlu0 %172
    %v175 = vsel %vm53, %v173, 0
    %177 = vmatpush.bf16.msra.mxu0 0
    %178 = vmatpush.bf16.msra.mxu0 0
    %179 = vmatpush.bf16.msra.mxu0 0
    %180 = vmatpush.bf16.msra.mxu0 0
    %181 = vmatpush.bf16.msra.mxu0 0
    %182 = vmatpush.bf16.msra.mxu0 0
    %183 = vmatpush.bf16.msra.mxu0 0
    %184 = vmatpush.bf16.msra.mxu0 %v59
    %185 = vmatmul.bf16.gmra.mxu0 %v175
    %v186 = vpop.f32.mrf.mxu0
    %v187 = vadd.f32 0.0, %v186
    %v188 = vpop.f32.mrf.mxu0
    %189 = vdwg.mxu0
    %v190 = vmax.f32 %v171, %v187
    %191 = vrot.lane.b32.xlu0 %v76, 121
    %v192 = vpop.permute.xlu0 %191
    %v194 = vsel %vm53, %v192, 0
    %196 = vmatpush.bf16.msra.mxu0 0
    %197 = vmatpush.bf16.msra.mxu0 0
    %198 = vmatpush.bf16.msra.mxu0 0
    %199 = vmatpush.bf16.msra.mxu0 0
    %200 = vmatpush.bf16.msra.mxu0 0
    %201 = vmatpush.bf16.msra.mxu0 0
    %202 = vmatpush.bf16.msra.mxu0 0
    %203 = vmatpush.bf16.msra.mxu0 %v59
    %204 = vmatmul.bf16.gmra.mxu0 %v194
    %v205 = vpop.f32.mrf.mxu0
    %v206 = vadd.f32 0.0, %v205
    %v207 = vpop.f32.mrf.mxu0
    %208 = vdwg.mxu0
    %v209 = vmax.f32 %v190, %v206
    %210 = vrot.lane.b32.xlu0 %v76, 120
    %v211 = vpop.permute.xlu0 %210
    %v213 = vsel %vm53, %v211, 0
    %215 = vmatpush.bf16.msra.mxu0 0
    %216 = vmatpush.bf16.msra.mxu0 0
    %217 = vmatpush.bf16.msra.mxu0 0
    %218 = vmatpush.bf16.msra.mxu0 0
    %219 = vmatpush.bf16.msra.mxu0 0
    %220 = vmatpush.bf16.msra.mxu0 0
    %221 = vmatpush.bf16.msra.mxu0 0
    %222 = vmatpush.bf16.msra.mxu0 %v59
    %223 = vmatmul.bf16.gmra.mxu0 %v213
    %v224 = vpop.f32.mrf.mxu0
    %v225 = vadd.f32 0.0, %v224
    %v226 = vpop.f32.mrf.mxu0
    %227 = vdwg.mxu0
    %v228 = vmax.f32 %v209, %v225
    %229 = vrot.lane.b32.xlu0 %v76, 119
    %v230 = vpop.permute.xlu0 %229
    %v232 = vsel %vm53, %v230, 0
    %234 = vmatpush.bf16.msra.mxu0 0
    %235 = vmatpush.bf16.msra.mxu0 0
    %236 = vmatpush.bf16.msra.mxu0 0
    %237 = vmatpush.bf16.msra.mxu0 0
    %238 = vmatpush.bf16.msra.mxu0 0
    %239 = vmatpush.bf16.msra.mxu0 0
    %240 = vmatpush.bf16.msra.mxu0 0
    %241 = vmatpush.bf16.msra.mxu0 %v59
    %242 = vmatmul.bf16.gmra.mxu0 %v232
    %v243 = vpop.f32.mrf.mxu0
    %v244 = vadd.f32 0.0, %v243
    %v245 = vpop.f32.mrf.mxu0
    %246 = vdwg.mxu0
    %v247 = vmax.f32 %v228, %v244
    %248 = vrot.lane.b32.xlu0 %v76, 118
    %v249 = vpop.permute.xlu0 %248
    %v251 = vsel %vm53, %v249, 0
    %253 = vmatpush.bf16.msra.mxu0 0
    %254 = vmatpush.bf16.msra.mxu0 0
    %255 = vmatpush.bf16.msra.mxu0 0
    %256 = vmatpush.bf16.msra.mxu0 0
    %257 = vmatpush.bf16.msra.mxu0 0
    %258 = vmatpush.bf16.msra.mxu0 0
    %259 = vmatpush.bf16.msra.mxu0 0
    %260 = vmatpush.bf16.msra.mxu0 %v59
    %261 = vmatmul.bf16.gmra.mxu0 %v251
    %v262 = vpop.f32.mrf.mxu0
    %v263 = vadd.f32 0.0, %v262
    %v264 = vpop.f32.mrf.mxu0
    %265 = vdwg.mxu0
    %v266 = vmax.f32 %v247, %v263
    %267 = vrot.lane.b32.xlu0 %v76, 117
    %v268 = vpop.permute.xlu0 %267
    %v270 = vsel %vm53, %v268, 0
    %272 = vmatpush.bf16.msra.mxu0 0
    %273 = vmatpush.bf16.msra.mxu0 0
    %274 = vmatpush.bf16.msra.mxu0 0
    %275 = vmatpush.bf16.msra.mxu0 0
    %276 = vmatpush.bf16.msra.mxu0 0
    %277 = vmatpush.bf16.msra.mxu0 0
    %278 = vmatpush.bf16.msra.mxu0 0
    %279 = vmatpush.bf16.msra.mxu0 %v59
    %280 = vmatmul.bf16.gmra.mxu0 %v270
    %v281 = vpop.f32.mrf.mxu0
    %v282 = vadd.f32 0.0, %v281
    %v283 = vpop.f32.mrf.mxu0
    %284 = vdwg.mxu0
    %v285 = vmax.f32 %v266, %v282
    %286 = vrot.lane.b32.xlu0 %v76, 116
    %v287 = vpop.permute.xlu0 %286
    %v289 = vsel %vm53, %v287, 0
    %291 = vmatpush.bf16.msra.mxu0 0
    %292 = vmatpush.bf16.msra.mxu0 0
    %293 = vmatpush.bf16.msra.mxu0 0
    %294 = vmatpush.bf16.msra.mxu0 0
    %295 = vmatpush.bf16.msra.mxu0 0
    %296 = vmatpush.bf16.msra.mxu0 0
    %297 = vmatpush.bf16.msra.mxu0 0
    %298 = vmatpush.bf16.msra.mxu0 %v59
    %299 = vmatmul.bf16.gmra.mxu0 %v289
    %v300 = vpop.f32.mrf.mxu0
    %v301 = vadd.f32 0.0, %v300
    %v302 = vpop.f32.mrf.mxu0
    %303 = vdwg.mxu0
    %v304 = vmax.f32 %v285, %v301
    %305 = vrot.lane.b32.xlu0 %v76, 115
    %v306 = vpop.permute.xlu0 %305
    %v308 = vsel %vm53, %v306, 0
    %310 = vmatpush.bf16.msra.mxu0 0
    %311 = vmatpush.bf16.msra.mxu0 0
    %312 = vmatpush.bf16.msra.mxu0 0
    %313 = vmatpush.bf16.msra.mxu0 0
    %314 = vmatpush.bf16.msra.mxu0 0
    %315 = vmatpush.bf16.msra.mxu0 0
    %316 = vmatpush.bf16.msra.mxu0 0
    %317 = vmatpush.bf16.msra.mxu0 %v59
    %318 = vmatmul.bf16.gmra.mxu0 %v308
    %v319 = vpop.f32.mrf.mxu0
    %v320 = vadd.f32 0.0, %v319
    %v321 = vpop.f32.mrf.mxu0
    %322 = vdwg.mxu0
    %v323 = vmax.f32 %v304, %v320
    %324 = vrot.lane.b32.xlu0 %v76, 114
    %v325 = vpop.permute.xlu0 %324
    %v327 = vsel %vm53, %v325, 0
    %329 = vmatpush.bf16.msra.mxu0 0
    %330 = vmatpush.bf16.msra.mxu0 0
    %331 = vmatpush.bf16.msra.mxu0 0
    %332 = vmatpush.bf16.msra.mxu0 0
    %333 = vmatpush.bf16.msra.mxu0 0
    %334 = vmatpush.bf16.msra.mxu0 0
    %335 = vmatpush.bf16.msra.mxu0 0
    %336 = vmatpush.bf16.msra.mxu0 %v59
    %337 = vmatmul.bf16.gmra.mxu0 %v327
    %v338 = vpop.f32.mrf.mxu0
    %v339 = vadd.f32 0.0, %v338
    %v340 = vpop.f32.mrf.mxu0
    %341 = vdwg.mxu0
    %v342 = vmax.f32 %v323, %v339
    %343 = vrot.lane.b32.xlu0 %v76, 113
    %v344 = vpop.permute.xlu0 %343
    %v346 = vsel %vm53, %v344, 0
    %348 = vmatpush.bf16.msra.mxu0 0
    %349 = vmatpush.bf16.msra.mxu0 0
    %350 = vmatpush.bf16.msra.mxu0 0
    %351 = vmatpush.bf16.msra.mxu0 0
    %352 = vmatpush.bf16.msra.mxu0 0
    %353 = vmatpush.bf16.msra.mxu0 0
    %354 = vmatpush.bf16.msra.mxu0 0
    %355 = vmatpush.bf16.msra.mxu0 %v59
    %356 = vmatmul.bf16.gmra.mxu0 %v346
    %v357 = vpop.f32.mrf.mxu0
    %v358 = vadd.f32 0.0, %v357
    %v359 = vpop.f32.mrf.mxu0
    %360 = vdwg.mxu0
    %v361 = vmax.f32 %v342, %v358
    %362 = vrot.lane.b32.xlu0 %v76, 112
    %v363 = vpop.permute.xlu0 %362
    %v365 = vsel %vm53, %v363, 0
    %367 = vmatpush.bf16.msra.mxu0 0
    %368 = vmatpush.bf16.msra.mxu0 0
    %369 = vmatpush.bf16.msra.mxu0 0
    %370 = vmatpush.bf16.msra.mxu0 0
    %371 = vmatpush.bf16.msra.mxu0 0
    %372 = vmatpush.bf16.msra.mxu0 0
    %373 = vmatpush.bf16.msra.mxu0 0
    %374 = vmatpush.bf16.msra.mxu0 %v59
    %375 = vmatmul.bf16.gmra.mxu0 %v365
    %v376 = vpop.f32.mrf.mxu0
    %v377 = vadd.f32 0.0, %v376
    %v378 = vpop.f32.mrf.mxu0
    %379 = vdwg.mxu0
    %v380 = vmax.f32 %v361, %v377
    %381 = vrot.lane.b32.xlu0 %v76, 111
    %v382 = vpop.permute.xlu0 %381
    %v384 = vsel %vm53, %v382, 0
    %386 = vmatpush.bf16.msra.mxu0 0
    %387 = vmatpush.bf16.msra.mxu0 0
    %388 = vmatpush.bf16.msra.mxu0 0
    %389 = vmatpush.bf16.msra.mxu0 0
    %390 = vmatpush.bf16.msra.mxu0 0
    %391 = vmatpush.bf16.msra.mxu0 0
    %392 = vmatpush.bf16.msra.mxu0 0
    %393 = vmatpush.bf16.msra.mxu0 %v59
    %394 = vmatmul.bf16.gmra.mxu0 %v384
    %v395 = vpop.f32.mrf.mxu0
    %v396 = vadd.f32 0.0, %v395
    %v397 = vpop.f32.mrf.mxu0
    %398 = vdwg.mxu0
    %v399 = vmax.f32 %v380, %v396
    %400 = vrot.lane.b32.xlu0 %v76, 110
    %v401 = vpop.permute.xlu0 %400
    %v403 = vsel %vm53, %v401, 0
    %405 = vmatpush.bf16.msra.mxu0 0
    %406 = vmatpush.bf16.msra.mxu0 0
    %407 = vmatpush.bf16.msra.mxu0 0
    %408 = vmatpush.bf16.msra.mxu0 0
    %409 = vmatpush.bf16.msra.mxu0 0
    %410 = vmatpush.bf16.msra.mxu0 0
    %411 = vmatpush.bf16.msra.mxu0 0
    %412 = vmatpush.bf16.msra.mxu0 %v59
    %413 = vmatmul.bf16.gmra.mxu0 %v403
    %v414 = vpop.f32.mrf.mxu0
    %v415 = vadd.f32 0.0, %v414
    %v416 = vpop.f32.mrf.mxu0
    %417 = vdwg.mxu0
    %v418 = vmax.f32 %v399, %v415
    %419 = vrot.lane.b32.xlu0 %v76, 109
    %v420 = vpop.permute.xlu0 %419
    %v422 = vsel %vm53, %v420, 0
    %424 = vmatpush.bf16.msra.mxu0 0
    %425 = vmatpush.bf16.msra.mxu0 0
    %426 = vmatpush.bf16.msra.mxu0 0
    %427 = vmatpush.bf16.msra.mxu0 0
    %428 = vmatpush.bf16.msra.mxu0 0
    %429 = vmatpush.bf16.msra.mxu0 0
    %430 = vmatpush.bf16.msra.mxu0 0
    %431 = vmatpush.bf16.msra.mxu0 %v59
    %432 = vmatmul.bf16.gmra.mxu0 %v422
    %v433 = vpop.f32.mrf.mxu0
    %v434 = vadd.f32 0.0, %v433
    %v435 = vpop.f32.mrf.mxu0
    %436 = vdwg.mxu0
    %v437 = vmax.f32 %v418, %v434
    %438 = vrot.lane.b32.xlu0 %v76, 108
    %v439 = vpop.permute.xlu0 %438
    %v441 = vsel %vm53, %v439, 0
    %443 = vmatpush.bf16.msra.mxu0 0
    %444 = vmatpush.bf16.msra.mxu0 0
    %445 = vmatpush.bf16.msra.mxu0 0
    %446 = vmatpush.bf16.msra.mxu0 0
    %447 = vmatpush.bf16.msra.mxu0 0
    %448 = vmatpush.bf16.msra.mxu0 0
    %449 = vmatpush.bf16.msra.mxu0 0
    %450 = vmatpush.bf16.msra.mxu0 %v59
    %451 = vmatmul.bf16.gmra.mxu0 %v441
    %v452 = vpop.f32.mrf.mxu0
    %v453 = vadd.f32 0.0, %v452
    %v454 = vpop.f32.mrf.mxu0
    %455 = vdwg.mxu0
    %v456 = vmax.f32 %v437, %v453
    %457 = vrot.lane.b32.xlu0 %v76, 107
    %v458 = vpop.permute.xlu0 %457
    %v460 = vsel %vm53, %v458, 0
    %462 = vmatpush.bf16.msra.mxu0 0
    %463 = vmatpush.bf16.msra.mxu0 0
    %464 = vmatpush.bf16.msra.mxu0 0
    %465 = vmatpush.bf16.msra.mxu0 0
    %466 = vmatpush.bf16.msra.mxu0 0
    %467 = vmatpush.bf16.msra.mxu0 0
    %468 = vmatpush.bf16.msra.mxu0 0
    %469 = vmatpush.bf16.msra.mxu0 %v59
    %470 = vmatmul.bf16.gmra.mxu0 %v460
    %v471 = vpop.f32.mrf.mxu0
    %v472 = vadd.f32 0.0, %v471
    %v473 = vpop.f32.mrf.mxu0
    %474 = vdwg.mxu0
    %v475 = vmax.f32 %v456, %v472
    %476 = vrot.lane.b32.xlu0 %v76, 106
    %v477 = vpop.permute.xlu0 %476
    %v479 = vsel %vm53, %v477, 0
    %481 = vmatpush.bf16.msra.mxu0 0
    %482 = vmatpush.bf16.msra.mxu0 0
    %483 = vmatpush.bf16.msra.mxu0 0
    %484 = vmatpush.bf16.msra.mxu0 0
    %485 = vmatpush.bf16.msra.mxu0 0
    %486 = vmatpush.bf16.msra.mxu0 0
    %487 = vmatpush.bf16.msra.mxu0 0
    %488 = vmatpush.bf16.msra.mxu0 %v59
    %489 = vmatmul.bf16.gmra.mxu0 %v479
    %v490 = vpop.f32.mrf.mxu0
    %v491 = vadd.f32 0.0, %v490
    %v492 = vpop.f32.mrf.mxu0
    %493 = vdwg.mxu0
    %v494 = vmax.f32 %v475, %v491
    %495 = vrot.lane.b32.xlu0 %v76, 105
    %v496 = vpop.permute.xlu0 %495
    %v498 = vsel %vm53, %v496, 0
    %500 = vmatpush.bf16.msra.mxu0 0
    %501 = vmatpush.bf16.msra.mxu0 0
    %502 = vmatpush.bf16.msra.mxu0 0
    %503 = vmatpush.bf16.msra.mxu0 0
    %504 = vmatpush.bf16.msra.mxu0 0
    %505 = vmatpush.bf16.msra.mxu0 0
    %506 = vmatpush.bf16.msra.mxu0 0
    %507 = vmatpush.bf16.msra.mxu0 %v59
    %508 = vmatmul.bf16.gmra.mxu0 %v498
    %v509 = vpop.f32.mrf.mxu0
    %v510 = vadd.f32 0.0, %v509
    %v511 = vpop.f32.mrf.mxu0
    %512 = vdwg.mxu0
    %v513 = vmax.f32 %v494, %v510
    %514 = vrot.lane.b32.xlu0 %v76, 104
    %v515 = vpop.permute.xlu0 %514
    %v517 = vsel %vm53, %v515, 0
    %519 = vmatpush.bf16.msra.mxu0 0
    %520 = vmatpush.bf16.msra.mxu0 0
    %521 = vmatpush.bf16.msra.mxu0 0
    %522 = vmatpush.bf16.msra.mxu0 0
    %523 = vmatpush.bf16.msra.mxu0 0
    %524 = vmatpush.bf16.msra.mxu0 0
    %525 = vmatpush.bf16.msra.mxu0 0
    %526 = vmatpush.bf16.msra.mxu0 %v59
    %527 = vmatmul.bf16.gmra.mxu0 %v517
    %v528 = vpop.f32.mrf.mxu0
    %v529 = vadd.f32 0.0, %v528
    %v530 = vpop.f32.mrf.mxu0
    %531 = vdwg.mxu0
    %v532 = vmax.f32 %v513, %v529
    %533 = vrot.lane.b32.xlu0 %v76, 103
    %v534 = vpop.permute.xlu0 %533
    %v536 = vsel %vm53, %v534, 0
    %538 = vmatpush.bf16.msra.mxu0 0
    %539 = vmatpush.bf16.msra.mxu0 0
    %540 = vmatpush.bf16.msra.mxu0 0
    %541 = vmatpush.bf16.msra.mxu0 0
    %542 = vmatpush.bf16.msra.mxu0 0
    %543 = vmatpush.bf16.msra.mxu0 0
    %544 = vmatpush.bf16.msra.mxu0 0
    %545 = vmatpush.bf16.msra.mxu0 %v59
    %546 = vmatmul.bf16.gmra.mxu0 %v536
    %v547 = vpop.f32.mrf.mxu0
    %v548 = vadd.f32 0.0, %v547
    %v549 = vpop.f32.mrf.mxu0
    %550 = vdwg.mxu0
    %v551 = vmax.f32 %v532, %v548
    %552 = vrot.lane.b32.xlu0 %v76, 102
    %v553 = vpop.permute.xlu0 %552
    %v555 = vsel %vm53, %v553, 0
    %557 = vmatpush.bf16.msra.mxu0 0
    %558 = vmatpush.bf16.msra.mxu0 0
    %559 = vmatpush.bf16.msra.mxu0 0
    %560 = vmatpush.bf16.msra.mxu0 0
    %561 = vmatpush.bf16.msra.mxu0 0
    %562 = vmatpush.bf16.msra.mxu0 0
    %563 = vmatpush.bf16.msra.mxu0 0
    %564 = vmatpush.bf16.msra.mxu0 %v59
    %565 = vmatmul.bf16.gmra.mxu0 %v555
    %v566 = vpop.f32.mrf.mxu0
    %v567 = vadd.f32 0.0, %v566
    %v568 = vpop.f32.mrf.mxu0
    %569 = vdwg.mxu0
    %v570 = vmax.f32 %v551, %v567
    %571 = vrot.lane.b32.xlu0 %v76, 101
    %v572 = vpop.permute.xlu0 %571
    %v574 = vsel %vm53, %v572, 0
    %576 = vmatpush.bf16.msra.mxu0 0
    %577 = vmatpush.bf16.msra.mxu0 0
    %578 = vmatpush.bf16.msra.mxu0 0
    %579 = vmatpush.bf16.msra.mxu0 0
    %580 = vmatpush.bf16.msra.mxu0 0
    %581 = vmatpush.bf16.msra.mxu0 0
    %582 = vmatpush.bf16.msra.mxu0 0
    %583 = vmatpush.bf16.msra.mxu0 %v59
    %584 = vmatmul.bf16.gmra.mxu0 %v574
    %v585 = vpop.f32.mrf.mxu0
    %v586 = vadd.f32 0.0, %v585
    %v587 = vpop.f32.mrf.mxu0
    %588 = vdwg.mxu0
    %v589 = vmax.f32 %v570, %v586
    %590 = vrot.lane.b32.xlu0 %v76, 100
    %v591 = vpop.permute.xlu0 %590
    %v593 = vsel %vm53, %v591, 0
    %595 = vmatpush.bf16.msra.mxu0 0
    %596 = vmatpush.bf16.msra.mxu0 0
    %597 = vmatpush.bf16.msra.mxu0 0
    %598 = vmatpush.bf16.msra.mxu0 0
    %599 = vmatpush.bf16.msra.mxu0 0
    %600 = vmatpush.bf16.msra.mxu0 0
    %601 = vmatpush.bf16.msra.mxu0 0
    %602 = vmatpush.bf16.msra.mxu0 %v59
    %603 = vmatmul.bf16.gmra.mxu0 %v593
    %v604 = vpop.f32.mrf.mxu0
    %v605 = vadd.f32 0.0, %v604
    %v606 = vpop.f32.mrf.mxu0
    %607 = vdwg.mxu0
    %v608 = vmax.f32 %v589, %v605
    %609 = vrot.lane.b32.xlu0 %v76, 99
    %v610 = vpop.permute.xlu0 %609
    %v612 = vsel %vm53, %v610, 0
    %614 = vmatpush.bf16.msra.mxu0 0
    %615 = vmatpush.bf16.msra.mxu0 0
    %616 = vmatpush.bf16.msra.mxu0 0
    %617 = vmatpush.bf16.msra.mxu0 0
    %618 = vmatpush.bf16.msra.mxu0 0
    %619 = vmatpush.bf16.msra.mxu0 0
    %620 = vmatpush.bf16.msra.mxu0 0
    %621 = vmatpush.bf16.msra.mxu0 %v59
    %622 = vmatmul.bf16.gmra.mxu0 %v612
    %v623 = vpop.f32.mrf.mxu0
    %v624 = vadd.f32 0.0, %v623
    %v625 = vpop.f32.mrf.mxu0
    %626 = vdwg.mxu0
    %v627 = vmax.f32 %v608, %v624
    %v628 = vld [vmem:[%s2] sm:$0x1]
    %v630 = vperm.slane %v628, 0
    %v632 = vadd.f32 %v627, %v630
    %v633 = vmax.f32 %v632, 0.0
    %v634 = vld [vmem:[#allocation2] sm:$0x1]
    %v635 = vld [vmem:[%s3] sm:$0x1]
    %v637 = vperm.slane %v635, 0
    %v639 = vmul.f32 %v633, %v637
    %640 = vadd.xlane.f32.xlu0 %v639
    %v641 = vpop.xlane.xlu0 %640
    %v643 = vperm.slane %v634, 0
    %v645 = vadd.f32 %v641, %v643
    %v646 = vsub.f32 0.0, %v645
    %v647 = vmul.f32 %v646, 1.442695
    %v648 = vpow.pop %v647
    %v649 = vadd.f32 %v648, 1.0
    %v650 = vrcp.pop %v649
    %vm651 = vcmask 7168
    %652 = vst.msk [vmem:[%s5] sm:$0xff] %vm651, %v650
    // Predicated region
    $region30: #{tpu_custom_call.1} parent=1 // pred_check
      _
    $region31: #{tpu_custom_call.1} parent=1 // pred_check_branch
      %654 = sbr.rel (0) target = $region33
    $region32: #{tpu_custom_call.1} parent=1 // pred_region
      _
    $region33: #{tpu_custom_call.1} parent=1 // pred_fallthru
      _
    // Predicated region
    $region34: #{tpu_custom_call.1} parent=1 // pred_check
      _
    $region35: #{tpu_custom_call.1} parent=1 // pred_check_branch
      %656 = sbr.rel (0) target = $region37
    $region36: #{tpu_custom_call.1} parent=1 // pred_region
      _
    $region37: #{tpu_custom_call.1} parent=1 // pred_fallthru
      _
    %657 = vsyncpa [#allocation4], 1
    %658 = vsyncpa [#allocation6], 1

</llo_original>
